<compile_context>
chip_gen: v5e
topology: v5e:2x2
jax: 0.10.0
libtpu: 0.0.40
codegen_flags: <defaults>
</compile_context>

<pallas_src>
import functools

import jax
import jax.numpy as jnp
from jax.experimental import pallas as pl
from jax.experimental.pallas import tpu as pltpu

_SUBLANE = 8  # f32 sublane granularity for the row (second-to-last) axis


def _round_up(x, m):
    return ((x + m - 1) // m) * m


def _fused_mlp_kernel(x_ref, *refs, num_layers, sigmoid_output):
    """All MLP layers over one row-tile; hidden activations never leave VMEM/vregs.

    x_ref : [TILE_M, IN]                     (true, unpadded feature width)
    refs  : w0, b0, ..., w_{L-1}, b_{L-1}, o_ref
        w_i : [IN_i, OUT_i]  full-array block, (in, out) layout, bf16 or f32
        b_i : [1, OUT_i]     full-array block, f32
    o_ref : [TILE_M, OUT]                    (true, unpadded feature width)
    """
    o_ref = refs[-1]
    h = x_ref[...]
    for i in range(num_layers):                      # static unroll
        w = refs[2 * i][...]
        b = refs[2 * i + 1][...]
        # bf16 (or f32) MXU inputs, f32 accumulation.
        h = jnp.dot(h.astype(w.dtype), w, preferred_element_type=jnp.float32)
        h = h + b.astype(jnp.float32)
        if i < num_layers - 1:
            h = jnp.maximum(h, 0.0)                  # ReLU on hidden layers (VPU)
    if sigmoid_output:
        h = jax.nn.sigmoid(h)                        # transcendental -> EUP slot
    o_ref[...] = h.astype(o_ref.dtype)


def prepare_mlp_params(weights, biases, param_dtype=jnp.bfloat16):
    """One-time parameter prep, hoisted out of the forward path (cache this!).

    Transposes PyTorch (out, in) weights to (in, out) and casts them to
    `param_dtype` (bf16 by default).  Biases stay f32 (negligible bytes, added
    post-accumulation).  No feature-dim padding is applied.
    """
    prepped = []
    out_dim = int(weights[-1].shape[0])
    for w, b in zip(weights, biases):
        w_t = jnp.asarray(w).T.astype(param_dtype)              # (in, out)
        b_row = jnp.asarray(b).astype(jnp.float32).reshape(1, -1)
        prepped.append((w_t, b_row))
    return prepped, out_dim


def _choose_row_tile(m, tile_m):
    """Row tile <= tile_m, 8-aligned (or == m), and yielding >= 2 grid steps
    when there is enough work so the "parallel" axis shards across both
    TensorCores on v7x."""
    if m <= _SUBLANE:
        return m                                     # single tiny block (full-dim)
    tile = min(tile_m, _round_up(m, _SUBLANE))
    if pl.cdiv(m, tile) < 2:
        tile = max(_round_up(pl.cdiv(m, 2), _SUBLANE), _SUBLANE)
    return tile


def mlp_forward_prepared(x, prepped, out_dim, sigmoid_output=False, tile_m=1024):
    """x: [..., input_dim] -> [..., out_dim] via a single fused pallas_call."""
    num_layers = len(prepped)
    lead_shape = x.shape[:-1]
    in_dim = x.shape[-1]

    xm = x.reshape((-1, in_dim))                     # metadata reshape, no HBM pass
    m = xm.shape[0]
    out_dtype = x.dtype

    tile = _choose_row_tile(m, tile_m)
    num_blocks = pl.cdiv(m, tile)                    # boundary tile masked by Pallas

    # VMEM budget: double-buffered x/out row tiles, (conservatively) double-
    # buffered params, plus unrolled f32 intermediates.  v7x has only 64 MiB
    # physical VMEM, so cap the scoped limit there.
    widest = max(max(w.shape) for w, _ in prepped)
    param_bytes = sum(w.size * w.dtype.itemsize + b.size * b.dtype.itemsize
                      for w, b in prepped)
    est = (2 * tile * in_dim * xm.dtype.itemsize
           + 2 * tile * out_dim * xm.dtype.itemsize
           + 2 * param_bytes
           + 6 * tile * widest * 4)
    vmem_limit = int(min(max(2 * est, 32 * 1024 * 1024), 64 * 1024 * 1024))

    flops = 2 * m * sum(w.shape[0] * w.shape[1] for w, _ in prepped)
    transcendentals = m * out_dim if sigmoid_output else 0
    bytes_accessed = (xm.size * xm.dtype.itemsize + param_bytes
                      + m * out_dim * xm.dtype.itemsize)
    cost = pl.CostEstimate(flops=flops, transcendentals=transcendentals,
                           bytes_accessed=bytes_accessed)

    kernel = functools.partial(_fused_mlp_kernel, num_layers=num_layers,
                               sigmoid_output=sigmoid_output)

    args = [xm]
    for w_t, b_row in prepped:
        args.extend([w_t, b_row])

    def build(single_buffer_params):
        pkw = {"pipeline_mode": pl.Buffered(1)} if single_buffer_params else {}
        in_specs = [pl.BlockSpec((tile, in_dim), lambda i: (i, 0))]
        for w_t, b_row in prepped:
            # Constant block index -> params stay VMEM-resident across grid steps.
            in_specs.append(pl.BlockSpec(w_t.shape, lambda i: (0, 0), **pkw))
            in_specs.append(pl.BlockSpec(b_row.shape, lambda i: (0, 0), **pkw))
        return pl.pallas_call(
            kernel,
            out_shape=jax.ShapeDtypeStruct((m, out_dim), out_dtype),
            grid=(num_blocks,),
            in_specs=in_specs,
            out_specs=pl.BlockSpec((tile, out_dim), lambda i: (i, 0)),
            compiler_params=pltpu.CompilerParams(
                dimension_semantics=("parallel",),
                vmem_limit_bytes=vmem_limit,
            ),
            cost_estimate=cost,
        )

    try:
        out = build(True)(*args)
    except Exception:
        # Fallback if this jax build rejects pipeline_mode / Buffered(1):
        # default 2-deep buffering of the (tiny) params is still correct.
        out = build(False)(*args)

    return out.reshape(lead_shape + (out_dim,))


def mlp_forward(x, weights, biases, sigmoid_output=False, tile_m=1024,
                param_dtype=jnp.bfloat16):
    """Convenience one-shot wrapper.  In a loop, call prepare_mlp_params ONCE
    at module init and reuse `prepped` with mlp_forward_prepared — the prep
    transposes and casts every weight and must not run per forward."""
    prepped, out_dim = prepare_mlp_params(weights, biases, param_dtype=param_dtype)
    return mlp_forward_prepared(x, prepped, out_dim,
                                sigmoid_output=sigmoid_output, tile_m=tile_m)


def _reference_mlp(x, weights, biases, sigmoid_output=False):
    num_layers = len(weights)
    h = x
    for i, (w, b) in enumerate(zip(weights, biases)):
        h = jnp.dot(h, w.T, precision=jax.lax.Precision.HIGHEST) + b
        if i < num_layers - 1:
            h = jnp.maximum(h, 0.0)
    if sigmoid_output:
        h = jax.nn.sigmoid(h)
    return h


if __name__ == "__main__":
    # Small shapes consistent with the module: tokens [batch, seq, input_dim].
    batch, seq = 2, 8
    input_dim, hidden_dim, output_dim, num_layers = 32, 32, 16, 3
    sigmoid_output = True

    key = jax.random.PRNGKey(0)
    kx, *kps = jax.random.split(key, 1 + 2 * num_layers)

    x = jax.random.normal(kx, (batch, seq, input_dim), dtype=jnp.float32)

    # Deterministic parameter init (uniform, mimicking nn.Linear's default scale).
    dims_in = [input_dim] + [hidden_dim] * (num_layers - 1)
    dims_out = [hidden_dim] * (num_layers - 1) + [output_dim]
    weights, biases = [], []
    for li, (n_in, n_out) in enumerate(zip(dims_in, dims_out)):
        bound = 1.0 / (n_in ** 0.5)
        w = jax.random.uniform(kps[2 * li], (n_out, n_in),
                               minval=-bound, maxval=bound, dtype=jnp.float32)
        b = jax.random.uniform(kps[2 * li + 1], (n_out,),
                               minval=-bound, maxval=bound, dtype=jnp.float32)
        weights.append(w)
        biases.append(b)

    ref = _reference_mlp(x, weights, biases, sigmoid_output=sigmoid_output)

    # Production path: bf16 params (prep hoisted/cached), f32 accumulation.
    prepped_bf16, out_dim = prepare_mlp_params(weights, biases,
                                               param_dtype=jnp.bfloat16)
    out = jax.block_until_ready(
        mlp_forward_prepared(x, prepped_bf16, out_dim,
                             sigmoid_output=sigmoid_output))
    assert out.shape == (batch, seq, output_dim), out.shape
    assert jnp.allclose(out, ref, atol=3e-2, rtol=3e-2), float(
        jnp.max(jnp.abs(out - ref)))

    # f32-param path for a tighter numerical check of the same fused kernel.
    prepped_f32, _ = prepare_mlp_params(weights, biases, param_dtype=jnp.float32)
    out_f32 = jax.block_until_ready(
        mlp_forward_prepared(x, prepped_f32, out_dim,
                             sigmoid_output=sigmoid_output))
    assert jnp.allclose(out_f32, ref, atol=1e-2, rtol=1e-2), float(
        jnp.max(jnp.abs(out_f32 - ref)))

    print("KERNEL_OK")
</pallas_src>

<mosaic_0001>
module attributes {stable_mosaic.version = 11 : i64} {
  func.func @_fused_mlp_kernel(%arg0: i32, %arg1: memref<8x32xf32, #tpu.memory_space<vmem>>, %arg2: memref<32x32xbf16, #tpu.memory_space<vmem>>, %arg3: memref<1x32xf32, #tpu.memory_space<vmem>>, %arg4: memref<32x32xbf16, #tpu.memory_space<vmem>>, %arg5: memref<1x32xf32, #tpu.memory_space<vmem>>, %arg6: memref<32x16xbf16, #tpu.memory_space<vmem>>, %arg7: memref<1x16xf32, #tpu.memory_space<vmem>>, %arg8: memref<8x16xf32, #tpu.memory_space<vmem>>) attributes {dimension_semantics = [#tpu.dimension_semantics<parallel>], iteration_bounds = array<i64: 2>, scalar_prefetch = 0 : i64, scratch_operands = 0 : i64, tpu.core_type = #tpu.core_type<tc>, window_params = [{transform_indices = @transform_0, window_bounds = array<i64: 8, 32>}, {pipeline_mode = #tpu.pipeline_mode<synchronous>, transform_indices = @transform_1, window_bounds = array<i64: 32, 32>}, {pipeline_mode = #tpu.pipeline_mode<synchronous>, transform_indices = @transform_2, window_bounds = array<i64: 1, 32>}, {pipeline_mode = #tpu.pipeline_mode<synchronous>, transform_indices = @transform_3, window_bounds = array<i64: 32, 32>}, {pipeline_mode = #tpu.pipeline_mode<synchronous>, transform_indices = @transform_4, window_bounds = array<i64: 1, 32>}, {pipeline_mode = #tpu.pipeline_mode<synchronous>, transform_indices = @transform_5, window_bounds = array<i64: 32, 16>}, {pipeline_mode = #tpu.pipeline_mode<synchronous>, transform_indices = @transform_6, window_bounds = array<i64: 1, 16>}, {transform_indices = @transform_7, window_bounds = array<i64: 8, 16>}]} {
    %c0 = arith.constant 0 : index
    %c0_0 = arith.constant 0 : index
    %0 = vector.load %arg1[%c0, %c0_0] : memref<8x32xf32, #tpu.memory_space<vmem>>, vector<8x32xf32>
    %c0_1 = arith.constant 0 : index
    %c0_2 = arith.constant 0 : index
    %1 = vector.load %arg2[%c0_1, %c0_2] : memref<32x32xbf16, #tpu.memory_space<vmem>>, vector<32x32xbf16>
    %c0_3 = arith.constant 0 : index
    %c0_4 = arith.constant 0 : index
    %2 = vector.load %arg3[%c0_3, %c0_4] : memref<1x32xf32, #tpu.memory_space<vmem>>, vector<1x32xf32>
    %3 = arith.truncf %0 : vector<8x32xf32> to vector<8x32xbf16>
    %cst = arith.constant dense<0.000000e+00> : vector<8x32xf32>
    %4 = tpu.matmul %3, %1, %cst {dimension_numbers = #tpu.dot_dimension_numbers<[1], [0], [0], [1], [0, 0, 1, 1], [], []>} : vector<8x32xbf16>, vector<32x32xbf16>, vector<8x32xf32> -> vector<8x32xf32>
    %5 = vector.broadcast %2 : vector<1x32xf32> to vector<8x32xf32>
    %6 = arith.addf %4, %5 : vector<8x32xf32>
    %cst_5 = arith.constant 0.000000e+00 : f32
    %7 = vector.broadcast %cst_5 : f32 to vector<8x32xf32>
    %8 = arith.maximumf %6, %7 : vector<8x32xf32>
    %c0_6 = arith.constant 0 : index
    %c0_7 = arith.constant 0 : index
    %9 = vector.load %arg4[%c0_6, %c0_7] : memref<32x32xbf16, #tpu.memory_space<vmem>>, vector<32x32xbf16>
    %c0_8 = arith.constant 0 : index
    %c0_9 = arith.constant 0 : index
    %10 = vector.load %arg5[%c0_8, %c0_9] : memref<1x32xf32, #tpu.memory_space<vmem>>, vector<1x32xf32>
    %11 = arith.truncf %8 : vector<8x32xf32> to vector<8x32xbf16>
    %cst_10 = arith.constant dense<0.000000e+00> : vector<8x32xf32>
    %12 = tpu.matmul %11, %9, %cst_10 {dimension_numbers = #tpu.dot_dimension_numbers<[1], [0], [0], [1], [0, 0, 1, 1], [], []>} : vector<8x32xbf16>, vector<32x32xbf16>, vector<8x32xf32> -> vector<8x32xf32>
    %13 = vector.broadcast %10 : vector<1x32xf32> to vector<8x32xf32>
    %14 = arith.addf %12, %13 : vector<8x32xf32>
    %cst_11 = arith.constant 0.000000e+00 : f32
    %15 = vector.broadcast %cst_11 : f32 to vector<8x32xf32>
    %16 = arith.maximumf %14, %15 : vector<8x32xf32>
    %c0_12 = arith.constant 0 : index
    %c0_13 = arith.constant 0 : index
    %17 = vector.load %arg6[%c0_12, %c0_13] : memref<32x16xbf16, #tpu.memory_space<vmem>>, vector<32x16xbf16>
    %c0_14 = arith.constant 0 : index
    %c0_15 = arith.constant 0 : index
    %18 = vector.load %arg7[%c0_14, %c0_15] : memref<1x16xf32, #tpu.memory_space<vmem>>, vector<1x16xf32>
    %19 = arith.truncf %16 : vector<8x32xf32> to vector<8x32xbf16>
    %cst_16 = arith.constant dense<0.000000e+00> : vector<8x16xf32>
    %20 = tpu.matmul %19, %17, %cst_16 {dimension_numbers = #tpu.dot_dimension_numbers<[1], [0], [0], [1], [0, 0, 1, 1], [], []>} : vector<8x32xbf16>, vector<32x16xbf16>, vector<8x16xf32> -> vector<8x16xf32>
    %21 = vector.broadcast %18 : vector<1x16xf32> to vector<8x16xf32>
    %22 = arith.addf %20, %21 : vector<8x16xf32>
    %23 = arith.negf %22 : vector<8x16xf32>
    %24 = math.exp %23 : vector<8x16xf32>
    %cst_17 = arith.constant 1.000000e+00 : f32
    %25 = vector.broadcast %cst_17 : f32 to vector<8x16xf32>
    %26 = arith.addf %25, %24 : vector<8x16xf32>
    %27 = arith.divf %25, %26 : vector<8x16xf32>
    %c0_18 = arith.constant 0 : index
    %c0_19 = arith.constant 0 : index
    %28 = vector.load %arg8[%c0_18, %c0_19] : memref<8x16xf32, #tpu.memory_space<vmem>>, vector<8x16xf32>
    tpu.vector_store %arg8[%c0_18, %c0_19], %27 {strides = array<i32>} : memref<8x16xf32, #tpu.memory_space<vmem>>, vector<8x16xf32>,
    return
  }
  func.func @transform_0(%arg0: i32) -> (i32, i32) {
    %c0_i32 = arith.constant 0 : i32
    %c0_i32_0 = arith.constant 0 : i32
    return %arg0, %c0_i32 : i32, i32
  }
  func.func @transform_1(%arg0: i32) -> (i32, i32) {
    %c0_i32 = arith.constant 0 : i32
    %c0_i32_0 = arith.constant 0 : i32
    %c0_i32_1 = arith.constant 0 : i32
    return %c0_i32, %c0_i32_0 : i32, i32
  }
  func.func @transform_2(%arg0: i32) -> (i32, i32) {
    %c0_i32 = arith.constant 0 : i32
    %c0_i32_0 = arith.constant 0 : i32
    %c0_i32_1 = arith.constant 0 : i32
    return %c0_i32, %c0_i32_0 : i32, i32
  }
  func.func @transform_3(%arg0: i32) -> (i32, i32) {
    %c0_i32 = arith.constant 0 : i32
    %c0_i32_0 = arith.constant 0 : i32
    %c0_i32_1 = arith.constant 0 : i32
    return %c0_i32, %c0_i32_0 : i32, i32
  }
  func.func @transform_4(%arg0: i32) -> (i32, i32) {
    %c0_i32 = arith.constant 0 : i32
    %c0_i32_0 = arith.constant 0 : i32
    %c0_i32_1 = arith.constant 0 : i32
    return %c0_i32, %c0_i32_0 : i32, i32
  }
  func.func @transform_5(%arg0: i32) -> (i32, i32) {
    %c0_i32 = arith.constant 0 : i32
    %c0_i32_0 = arith.constant 0 : i32
    %c0_i32_1 = arith.constant 0 : i32
    return %c0_i32, %c0_i32_0 : i32, i32
  }
  func.func @transform_6(%arg0: i32) -> (i32, i32) {
    %c0_i32 = arith.constant 0 : i32
    %c0_i32_0 = arith.constant 0 : i32
    %c0_i32_1 = arith.constant 0 : i32
    return %c0_i32, %c0_i32_0 : i32, i32
  }
  func.func @transform_7(%arg0: i32) -> (i32, i32) {
    %c0_i32 = arith.constant 0 : i32
    %c0_i32_0 = arith.constant 0 : i32
    return %arg0, %c0_i32 : i32, i32
  }
}

module attributes {stable_mosaic.version = 11 : i64} {
  func.func @_fused_mlp_kernel(%arg0: i32, %arg1: memref<8x32xf32, #tpu.memory_space<vmem>>, %arg2: memref<32x32xbf16, #tpu.memory_space<vmem>>, %arg3: memref<1x32xf32, #tpu.memory_space<vmem>>, %arg4: memref<32x32xbf16, #tpu.memory_space<vmem>>, %arg5: memref<1x32xf32, #tpu.memory_space<vmem>>, %arg6: memref<32x16xbf16, #tpu.memory_space<vmem>>, %arg7: memref<1x16xf32, #tpu.memory_space<vmem>>, %arg8: memref<8x16xf32, #tpu.memory_space<vmem>>) attributes {dimension_semantics = [#tpu.dimension_semantics<parallel>], iteration_bounds = array<i64: 2>, scalar_prefetch = 0 : i64, scratch_operands = 0 : i64, tpu.core_type = #tpu.core_type<tc>, window_params = [{transform_indices = @transform_0, window_bounds = array<i64: 8, 32>}, {pipeline_mode = #tpu.pipeline_mode<synchronous>, transform_indices = @transform_1, window_bounds = array<i64: 32, 32>}, {pipeline_mode = #tpu.pipeline_mode<synchronous>, transform_indices = @transform_2, window_bounds = array<i64: 1, 32>}, {pipeline_mode = #tpu.pipeline_mode<synchronous>, transform_indices = @transform_3, window_bounds = array<i64: 32, 32>}, {pipeline_mode = #tpu.pipeline_mode<synchronous>, transform_indices = @transform_4, window_bounds = array<i64: 1, 32>}, {pipeline_mode = #tpu.pipeline_mode<synchronous>, transform_indices = @transform_5, window_bounds = array<i64: 32, 16>}, {pipeline_mode = #tpu.pipeline_mode<synchronous>, transform_indices = @transform_6, window_bounds = array<i64: 1, 16>}, {transform_indices = @transform_7, window_bounds = array<i64: 8, 16>}]} {
    %c0 = arith.constant 0 : index
    %c0_0 = arith.constant 0 : index
    %0 = vector.load %arg1[%c0, %c0_0] : memref<8x32xf32, #tpu.memory_space<vmem>>, vector<8x32xf32>
    %c0_1 = arith.constant 0 : index
    %c0_2 = arith.constant 0 : index
    %1 = vector.load %arg2[%c0_1, %c0_2] : memref<32x32xbf16, #tpu.memory_space<vmem>>, vector<32x32xbf16>
    %c0_3 = arith.constant 0 : index
    %c0_4 = arith.constant 0 : index
    %2 = vector.load %arg3[%c0_3, %c0_4] : memref<1x32xf32, #tpu.memory_space<vmem>>, vector<1x32xf32>
    %3 = arith.truncf %0 : vector<8x32xf32> to vector<8x32xbf16>
    %cst = arith.constant dense<0.000000e+00> : vector<8x32xf32>
    %4 = tpu.matmul %3, %1, %cst {dimension_numbers = #tpu.dot_dimension_numbers<[1], [0], [0], [1], [0, 0, 1, 1], [], []>} : vector<8x32xbf16>, vector<32x32xbf16>, vector<8x32xf32> -> vector<8x32xf32>
    %5 = vector.broadcast %2 : vector<1x32xf32> to vector<8x32xf32>
    %6 = arith.addf %4, %5 : vector<8x32xf32>
    %cst_5 = arith.constant 0.000000e+00 : f32
    %7 = vector.broadcast %cst_5 : f32 to vector<8x32xf32>
    %8 = arith.maximumf %6, %7 : vector<8x32xf32>
    %c0_6 = arith.constant 0 : index
    %c0_7 = arith.constant 0 : index
    %9 = vector.load %arg4[%c0_6, %c0_7] : memref<32x32xbf16, #tpu.memory_space<vmem>>, vector<32x32xbf16>
    %c0_8 = arith.constant 0 : index
    %c0_9 = arith.constant 0 : index
    %10 = vector.load %arg5[%c0_8, %c0_9] : memref<1x32xf32, #tpu.memory_space<vmem>>, vector<1x32xf32>
    %11 = arith.truncf %8 : vector<8x32xf32> to vector<8x32xbf16>
    %cst_10 = arith.constant dense<0.000000e+00> : vector<8x32xf32>
    %12 = tpu.matmul %11, %9, %cst_10 {dimension_numbers = #tpu.dot_dimension_numbers<[1], [0], [0], [1], [0, 0, 1, 1], [], []>} : vector<8x32xbf16>, vector<32x32xbf16>, vector<8x32xf32> -> vector<8x32xf32>
    %13 = vector.broadcast %10 : vector<1x32xf32> to vector<8x32xf32>
    %14 = arith.addf %12, %13 : vector<8x32xf32>
    %cst_11 = arith.constant 0.000000e+00 : f32
    %15 = vector.broadcast %cst_11 : f32 to vector<8x32xf32>
    %16 = arith.maximumf %14, %15 : vector<8x32xf32>
    %c0_12 = arith.constant 0 : index
    %c0_13 = arith.constant 0 : index
    %17 = vector.load %arg6[%c0_12, %c0_13] : memref<32x16xbf16, #tpu.memory_space<vmem>>, vector<32x16xbf16>
    %c0_14 = arith.constant 0 : index
    %c0_15 = arith.constant 0 : index
    %18 = vector.load %arg7[%c0_14, %c0_15] : memref<1x16xf32, #tpu.memory_space<vmem>>, vector<1x16xf32>
    %19 = arith.truncf %16 : vector<8x32xf32> to vector<8x32xbf16>
    %cst_16 = arith.constant dense<0.000000e+00> : vector<8x16xf32>
    %20 = tpu.matmul %19, %17, %cst_16 {dimension_numbers = #tpu.dot_dimension_numbers<[1], [0], [0], [1], [0, 0, 1, 1], [], []>} : vector<8x32xbf16>, vector<32x16xbf16>, vector<8x16xf32> -> vector<8x16xf32>
    %21 = vector.broadcast %18 : vector<1x16xf32> to vector<8x16xf32>
    %22 = arith.addf %20, %21 : vector<8x16xf32>
    %23 = arith.negf %22 : vector<8x16xf32>
    %24 = math.exp %23 : vector<8x16xf32>
    %cst_17 = arith.constant 1.000000e+00 : f32
    %25 = vector.broadcast %cst_17 : f32 to vector<8x16xf32>
    %26 = arith.addf %25, %24 : vector<8x16xf32>
    %27 = arith.divf %25, %26 : vector<8x16xf32>
    %c0_18 = arith.constant 0 : index
    %c0_19 = arith.constant 0 : index
    %28 = vector.load %arg8[%c0_18, %c0_19] : memref<8x16xf32, #tpu.memory_space<vmem>>, vector<8x16xf32>
    tpu.vector_store %arg8[%c0_18, %c0_19], %27 {strides = array<i32>} : memref<8x16xf32, #tpu.memory_space<vmem>>, vector<8x16xf32>,
    return
  }
  func.func @transform_0(%arg0: i32) -> (i32, i32) {
    %c0_i32 = arith.constant 0 : i32
    %c0_i32_0 = arith.constant 0 : i32
    return %arg0, %c0_i32 : i32, i32
  }
  func.func @transform_1(%arg0: i32) -> (i32, i32) {
    %c0_i32 = arith.constant 0 : i32
    %c0_i32_0 = arith.constant 0 : i32
    %c0_i32_1 = arith.constant 0 : i32
    return %c0_i32, %c0_i32_0 : i32, i32
  }
  func.func @transform_2(%arg0: i32) -> (i32, i32) {
    %c0_i32 = arith.constant 0 : i32
    %c0_i32_0 = arith.constant 0 : i32
    %c0_i32_1 = arith.constant 0 : i32
    return %c0_i32, %c0_i32_0 : i32, i32
  }
  func.func @transform_3(%arg0: i32) -> (i32, i32) {
    %c0_i32 = arith.constant 0 : i32
    %c0_i32_0 = arith.constant 0 : i32
    %c0_i32_1 = arith.constant 0 : i32
    return %c0_i32, %c0_i32_0 : i32, i32
  }
  func.func @transform_4(%arg0: i32) -> (i32, i32) {
    %c0_i32 = arith.constant 0 : i32
    %c0_i32_0 = arith.constant 0 : i32
    %c0_i32_1 = arith.constant 0 : i32
    return %c0_i32, %c0_i32_0 : i32, i32
  }
  func.func @transform_5(%arg0: i32) -> (i32, i32) {
    %c0_i32 = arith.constant 0 : i32
    %c0_i32_0 = arith.constant 0 : i32
    %c0_i32_1 = arith.constant 0 : i32
    return %c0_i32, %c0_i32_0 : i32, i32
  }
  func.func @transform_6(%arg0: i32) -> (i32, i32) {
    %c0_i32 = arith.constant 0 : i32
    %c0_i32_0 = arith.constant 0 : i32
    %c0_i32_1 = arith.constant 0 : i32
    return %c0_i32, %c0_i32_0 : i32, i32
  }
  func.func @transform_7(%arg0: i32) -> (i32, i32) {
    %c0_i32 = arith.constant 0 : i32
    %c0_i32_0 = arith.constant 0 : i32
    return %arg0, %c0_i32 : i32, i32
  }
}

</mosaic_0001>

<llo_original>
// kernel: tpu_custom_call.1
$region0: #{tpu_custom_call.1}
  #allocation0 [shape = 'u32[]', space=smem, size = 0x4, offset = 0x4, fixed_abs, tag = 'smem constant byte address 0x4 - core index']
  #allocation1 [shape = 'u32[72,128]{1,0:T(1,128)}', space=vmem, size = 0x9000, scoped, tag = 'internal scratch']
  %s0 = inlined_call_operand.vmem [shape: f32[16,32], index: 0, kind: input, shape index: {}]
  %s1 = inlined_call_operand.hbm [shape: bf16[32,32], index: 1, kind: input, shape index: {}]
  %s2 = inlined_call_operand.vmem [shape: f32[1,32], index: 2, kind: input, shape index: {}]
  %s3 = inlined_call_operand.hbm [shape: bf16[32,32], index: 3, kind: input, shape index: {}]
  %s4 = inlined_call_operand.vmem [shape: f32[1,32], index: 4, kind: input, shape index: {}]
  %s5 = inlined_call_operand.vmem [shape: bf16[32,16], index: 5, kind: input, shape index: {}]
  %s6 = inlined_call_operand.vmem [shape: f32[1,16], index: 6, kind: input, shape index: {}]
  %s7 = inlined_call_operand.hbm [shape: f32[16,16], index: 7, kind: output, shape index: {}]
  %s8 = sld [smem:[#allocation0]]
  $region69: #{tpu_custom_call.1} parent=0
    _
  %s10 = ssub.s32 1, %s8
  %s11 = scalar_select 0, %s10, %s8
  $region1: #{tpu_custom_call.1} parent=0
    #allocation2 [shape = 'u8[8192]{0}', space=vmem, size = 0x2000, scoped, tag = 'input window, operand 1, single buffered']
    #allocation3 [shape = 's32[2]{0}', space=sflag, size = 0x8, scoped, tag = 'scoped memory for tpu_custom_call.1']
    #allocation4 [shape = 's32[2]{0}', space=sflag, size = 0x8, scoped, tag = 'scoped memory for tpu_custom_call.1']
    #allocation5 [shape = 'u8[8192]{0}', space=vmem, size = 0x2000, scoped, tag = 'input window, operand 3, single buffered']
    #allocation6 [shape = 's32[1]{0}', space=sflag, size = 0x4, scoped, tag = 'scoped memory for tpu_custom_call.1']
    #allocation7 [shape = 'u8[8192]{0}', space=vmem, size = 0x2000, scoped, tag = 'output window, operand 0']
    %12 = vsyncpa [#allocation3], 0
    %13 = vsyncpa [#allocation6], 0
    %14 = vsyncpa [#allocation4], 0
    %s15 = scalar_lea.sflag [#allocation4], 1
    %16 = vsyncpa %s15, 0
    loop: start=0, step=1, limit=4
    $region2: #{tpu_custom_call.1} parent=1 // loop_pre_header
      _
    $region3: #{tpu_custom_call.1} parent=1 // loop_header
      %s18 = sphi 0, %s22
      %p19 = scmp.ge.s32.totalorder %s18, 4
      %s28 = sphi 0, %s30
      %s31 = sphi 0, %s28
      %s32 = sphi 0, %s31
      %s48 = sphi 0, %s32
      %s52 = sphi 0, %s52
      %s54 = sphi 0, %s52
      %s55 = sphi 0, %s54
      %s69 = sphi 0, %s55
      %s73 = sphi 0, %s73
      %s75 = sphi 0, %s73
      %s76 = sphi 0, %s75
      %s90 = sphi 0, %s76
      %s94 = sphi 0, %s94
      %s96 = sphi 0, %s94
      %s97 = sphi 0, %s96
      %s111 = sphi 0, %s97
      %s115 = sphi 0, %s115
      %s117 = sphi 0, %s115
      %s118 = sphi 0, %s117
      %s132 = sphi 0, %s118
      %s136 = sphi 0, %s136
      %s138 = sphi 0, %s136
      %s139 = sphi 0, %s138
      %s153 = sphi 0, %s139
      %s157 = sphi 0, %s157
      %s159 = sphi 0, %s157
      %s160 = sphi 0, %s159
      %s174 = sphi 0, %s160
      %s180 = sphi 0, %s182
      %s183 = sphi 0, %s180
      %s184 = sphi 0, %s183
      %s200 = sphi 0, %s184
    $region4: #{tpu_custom_call.1} parent=1 // loop_header_branch
      %21 = sbr.rel (%p19) target = $region8
    $region5: #{tpu_custom_call.1} parent=1 // loop_body
      %s23 = ssub.s32 %s18, 1
      %s24 = ssub.s32 %s18, 2
      %s25 = sadd.s32 %s18, 1
      %s26 = ssub.s32 %s18, %s25
      %p27 = scmp.eq.s32.totalorder %s26, 0
      %s29 = sadd.s32 %s28, 1
      %s30 = scalar_select %p27, %s28, %s29
      %p33 = pneg %p27
      %p34 = scmp.eq.s32.totalorder %s18, 1
      %p35 = por %p33, %p34
      %p36 = scmp.ne.s32.totalorder %s28, %s31
      %p37 = scmp.eq.s32.totalorder %s18, 0
      %p38 = por %p36, %p37
      %p39 = scmp.ne.s32.totalorder %s28, %s31
      %p40 = scmp.eq.s32.totalorder %s23, 1
      %p41 = por %p39, %p40
      %p42 = scmp.ne.s32.totalorder %s31, %s32
      %p43 = scmp.eq.s32.totalorder %s23, 0
      %p44 = por %p42, %p43
      %p45 = scmp.ne.s32.totalorder %s31, %s32
      %p46 = scmp.eq.s32.totalorder %s24, 1
      %p47 = por %p45, %p46
      %p49 = scmp.ne.s32.totalorder %s32, %s48
      %p50 = scmp.eq.s32.totalorder %s24, 0
      %p51 = por %p49, %p50
      %s53 = sadd.s32 %s52, 1
      %p56 = scmp.eq.s32.totalorder %s18, 1
      %p57 = scmp.ne.s32.totalorder %s52, %s54
      %p58 = scmp.eq.s32.totalorder %s18, 0
      %p59 = por %p57, %p58
      %p60 = scmp.ne.s32.totalorder %s52, %s54
      %p61 = scmp.eq.s32.totalorder %s23, 1
      %p62 = por %p60, %p61
      %p63 = scmp.ne.s32.totalorder %s54, %s55
      %p64 = scmp.eq.s32.totalorder %s23, 0
      %p65 = por %p63, %p64
      %p66 = scmp.ne.s32.totalorder %s54, %s55
      %p67 = scmp.eq.s32.totalorder %s24, 1
      %p68 = por %p66, %p67
      %p70 = scmp.ne.s32.totalorder %s55, %s69
      %p71 = scmp.eq.s32.totalorder %s24, 0
      %p72 = por %p70, %p71
      %s74 = sadd.s32 %s73, 1
      %p77 = scmp.eq.s32.totalorder %s18, 1
      %p78 = scmp.ne.s32.totalorder %s73, %s75
      %p79 = scmp.eq.s32.totalorder %s18, 0
      %p80 = por %p78, %p79
      %p81 = scmp.ne.s32.totalorder %s73, %s75
      %p82 = scmp.eq.s32.totalorder %s23, 1
      %p83 = por %p81, %p82
      %p84 = scmp.ne.s32.totalorder %s75, %s76
      %p85 = scmp.eq.s32.totalorder %s23, 0
      %p86 = por %p84, %p85
      %p87 = scmp.ne.s32.totalorder %s75, %s76
      %p88 = scmp.eq.s32.totalorder %s24, 1
      %p89 = por %p87, %p88
      %p91 = scmp.ne.s32.totalorder %s76, %s90
      %p92 = scmp.eq.s32.totalorder %s24, 0
      %p93 = por %p91, %p92
      %s95 = sadd.s32 %s94, 1
      %p98 = scmp.eq.s32.totalorder %s18, 1
      %p99 = scmp.ne.s32.totalorder %s94, %s96
      %p100 = scmp.eq.s32.totalorder %s18, 0
      %p101 = por %p99, %p100
      %p102 = scmp.ne.s32.totalorder %s94, %s96
      %p103 = scmp.eq.s32.totalorder %s23, 1
      %p104 = por %p102, %p103
      %p105 = scmp.ne.s32.totalorder %s96, %s97
      %p106 = scmp.eq.s32.totalorder %s23, 0
      %p107 = por %p105, %p106
      %p108 = scmp.ne.s32.totalorder %s96, %s97
      %p109 = scmp.eq.s32.totalorder %s24, 1
      %p110 = por %p108, %p109
      %p112 = scmp.ne.s32.totalorder %s97, %s111
      %p113 = scmp.eq.s32.totalorder %s24, 0
      %p114 = por %p112, %p113
      %s116 = sadd.s32 %s115, 1
      %p119 = scmp.eq.s32.totalorder %s18, 1
      %p120 = scmp.ne.s32.totalorder %s115, %s117
      %p121 = scmp.eq.s32.totalorder %s18, 0
      %p122 = por %p120, %p121
      %p123 = scmp.ne.s32.totalorder %s115, %s117
      %p124 = scmp.eq.s32.totalorder %s23, 1
      %p125 = por %p123, %p124
      %p126 = scmp.ne.s32.totalorder %s117, %s118
      %p127 = scmp.eq.s32.totalorder %s23, 0
      %p128 = por %p126, %p127
      %p129 = scmp.ne.s32.totalorder %s117, %s118
      %p130 = scmp.eq.s32.totalorder %s24, 1
      %p131 = por %p129, %p130
      %p133 = scmp.ne.s32.totalorder %s118, %s132
      %p134 = scmp.eq.s32.totalorder %s24, 0
      %p135 = por %p133, %p134
      %s137 = sadd.s32 %s136, 1
      %p140 = scmp.eq.s32.totalorder %s18, 1
      %p141 = scmp.ne.s32.totalorder %s136, %s138
      %p142 = scmp.eq.s32.totalorder %s18, 0
      %p143 = por %p141, %p142
      %p144 = scmp.ne.s32.totalorder %s136, %s138
      %p145 = scmp.eq.s32.totalorder %s23, 1
      %p146 = por %p144, %p145
      %p147 = scmp.ne.s32.totalorder %s138, %s139
      %p148 = scmp.eq.s32.totalorder %s23, 0
      %p149 = por %p147, %p148
      %p150 = scmp.ne.s32.totalorder %s138, %s139
      %p151 = scmp.eq.s32.totalorder %s24, 1
      %p152 = por %p150, %p151
      %p154 = scmp.ne.s32.totalorder %s139, %s153
      %p155 = scmp.eq.s32.totalorder %s24, 0
      %p156 = por %p154, %p155
      %s158 = sadd.s32 %s157, 1
      %p161 = scmp.eq.s32.totalorder %s18, 1
      %p162 = scmp.ne.s32.totalorder %s157, %s159
      %p163 = scmp.eq.s32.totalorder %s18, 0
      %p164 = por %p162, %p163
      %p165 = scmp.ne.s32.totalorder %s157, %s159
      %p166 = scmp.eq.s32.totalorder %s23, 1
      %p167 = por %p165, %p166
      %p168 = scmp.ne.s32.totalorder %s159, %s160
      %p169 = scmp.eq.s32.totalorder %s23, 0
      %p170 = por %p168, %p169
      %p171 = scmp.ne.s32.totalorder %s159, %s160
      %p172 = scmp.eq.s32.totalorder %s24, 1
      %p173 = por %p171, %p172
      %p175 = scmp.ne.s32.totalorder %s160, %s174
      %p176 = scmp.eq.s32.totalorder %s24, 0
      %p177 = por %p175, %p176
      %s178 = ssub.s32 %s18, %s25
      %p179 = scmp.eq.s32.totalorder %s178, 0
      %s181 = sadd.s32 %s180, 1
      %s182 = scalar_select %p179, %s180, %s181
      %p185 = pneg %p179
      %p186 = scmp.eq.s32.totalorder %s18, 1
      %p187 = por %p185, %p186
      %p188 = scmp.ne.s32.totalorder %s180, %s183
      %p189 = scmp.eq.s32.totalorder %s18, 0
      %p190 = por %p188, %p189
      %p191 = scmp.ne.s32.totalorder %s180, %s183
      %p192 = scmp.eq.s32.totalorder %s23, 1
      %p193 = por %p191, %p192
      %p194 = scmp.ne.s32.totalorder %s183, %s184
      %p195 = scmp.eq.s32.totalorder %s23, 0
      %p196 = por %p194, %p195
      %p197 = scmp.ne.s32.totalorder %s183, %s184
      %p198 = scmp.eq.s32.totalorder %s24, 1
      %p199 = por %p197, %p198
      %p201 = scmp.ne.s32.totalorder %s184, %s200
      %p202 = scmp.eq.s32.totalorder %s24, 0
      %p203 = por %p201, %p202
      %p204 = scmp.le.s32.totalorder 1, %s18
      %p205 = scmp.lt.s32.totalorder %s18, 3
      %p206 = pnand %p204, %p205
      %p207 = pneg %p206
      // Predicated region
      $region9: #{tpu_custom_call.1} parent=5 // pred_check
        _
      $region10: #{tpu_custom_call.1} parent=5 // pred_check_branch
        %209 = sbr.rel (%p206) target = $region12
      $region11: #{tpu_custom_call.1} parent=5 // pred_region
        %s210 = ssub.s32 %s18, 1
        // Predicated region
        $region13: #{tpu_custom_call.1} parent=11 // pred_check
          %p211 = pneg %p65
        $region14: #{tpu_custom_call.1} parent=11 // pred_check_branch
          %213 = sbr.rel (%p211) target = $region16
        $region15: #{tpu_custom_call.1} parent=11 // pred_region
          %215 = vsyncadd [#allocation3], 0
          %s216 = sshll.u32 %s1, 4
          %s217 = int_to_ptr.hbm [resolvable:$true] %s216
          %s218 = sshll.u32 [#allocation2], 4
          %s219 = int_to_ptr.vmem [resolvable:$true] %s218
          %224 = dma.hbm_to_vmem [thread:$0]  %s217, 256, %s219, [#allocation3], 64, 64, 4
        $region16: #{tpu_custom_call.1} parent=11 // pred_fallthru
          _
        // Predicated region
        $region17: #{tpu_custom_call.1} parent=11 // pred_check
          %p225 = pneg %p86
        $region18: #{tpu_custom_call.1} parent=11 // pred_check_branch
          %227 = sbr.rel (%p225) target = $region20
        $region19: #{tpu_custom_call.1} parent=11 // pred_region
          _
        $region20: #{tpu_custom_call.1} parent=11 // pred_fallthru
          _
        // Predicated region
        $region21: #{tpu_custom_call.1} parent=11 // pred_check
          %p228 = pneg %p107
        $region22: #{tpu_custom_call.1} parent=11 // pred_check_branch
          %230 = sbr.rel (%p228) target = $region24
        $region23: #{tpu_custom_call.1} parent=11 // pred_region
          %232 = vsyncadd [#allocation6], 0
          %s233 = sshll.u32 %s3, 4
          %s234 = int_to_ptr.hbm [resolvable:$true] %s233
          %s235 = sshll.u32 [#allocation5], 4
          %s236 = int_to_ptr.vmem [resolvable:$true] %s235
          %241 = dma.hbm_to_vmem [thread:$0]  %s234, 256, %s236, [#allocation6], 64, 64, 4
        $region24: #{tpu_custom_call.1} parent=11 // pred_fallthru
          _
        // Predicated region
        $region25: #{tpu_custom_call.1} parent=11 // pred_check
          %p242 = pneg %p128
        $region26: #{tpu_custom_call.1} parent=11 // pred_check_branch
          %244 = sbr.rel (%p242) target = $region28
        $region27: #{tpu_custom_call.1} parent=11 // pred_region
          _
        $region28: #{tpu_custom_call.1} parent=11 // pred_fallthru
          _
        // Predicated region
        $region29: #{tpu_custom_call.1} parent=11 // pred_check
          %p245 = pneg %p149
        $region30: #{tpu_custom_call.1} parent=11 // pred_check_branch
          %247 = sbr.rel (%p245) target = $region32
        $region31: #{tpu_custom_call.1} parent=11 // pred_region
          _
        $region32: #{tpu_custom_call.1} parent=11 // pred_fallthru
          _
        // Predicated region
        $region33: #{tpu_custom_call.1} parent=11 // pred_check
          %p248 = pneg %p170
        $region34: #{tpu_custom_call.1} parent=11 // pred_check_branch
          %250 = sbr.rel (%p248) target = $region36
        $region35: #{tpu_custom_call.1} parent=11 // pred_region
          _
        $region36: #{tpu_custom_call.1} parent=11 // pred_fallthru
          _
      $region12: #{tpu_custom_call.1} parent=5 // pred_fallthru
        _
      %p251 = scmp.lt.s32.totalorder %s18, 2
      // Predicated region
      $region37: #{tpu_custom_call.1} parent=5 // pred_check
        %p252 = pneg %p251
      $region38: #{tpu_custom_call.1} parent=5 // pred_check_branch
        %254 = sbr.rel (%p252) target = $region40
      $region39: #{tpu_custom_call.1} parent=5 // pred_region
        // Predicated region
        $region41: #{tpu_custom_call.1} parent=39 // pred_check
          %p255 = pneg %p38
        $region42: #{tpu_custom_call.1} parent=39 // pred_check_branch
          %257 = sbr.rel (%p255) target = $region44
        $region43: #{tpu_custom_call.1} parent=39 // pred_region
          %p258 = scmp.lt.s32.totalorder %s18, 1
          %s259 = scalar_select %p258, %s18, 1
          %s260 = smul.addr %s259, 8
          %s261 = scalar_lea.vmem %s0, %s260
        $region44: #{tpu_custom_call.1} parent=39 // pred_fallthru
          _
      $region40: #{tpu_custom_call.1} parent=5 // pred_fallthru
        _
      %p262 = scmp.le.s32.totalorder 1, %s18
      %p263 = scmp.lt.s32.totalorder %s18, 3
      %p264 = pnand %p262, %p263
      %p265 = pneg %p264
      // Predicated region
      $region45: #{tpu_custom_call.1} parent=5 // pred_check
        _
      $region46: #{tpu_custom_call.1} parent=5 // pred_check_branch
        %267 = sbr.rel (%p264) target = $region48
      $region47: #{tpu_custom_call.1} parent=5 // pred_region
        %s268 = ssub.s32 %s18, 1
        // Predicated region
        $region49: #{tpu_custom_call.1} parent=47 // pred_check
          %p269 = pneg %p65
        $region50: #{tpu_custom_call.1} parent=47 // pred_check_branch
          %271 = sbr.rel (%p269) target = $region52
        $region51: #{tpu_custom_call.1} parent=47 // pred_region
          %273 = dma.done [#allocation3], 256
        $region52: #{tpu_custom_call.1} parent=47 // pred_fallthru
          _
        // Predicated region
        $region53: #{tpu_custom_call.1} parent=47 // pred_check
          %p274 = pneg %p107
        $region54: #{tpu_custom_call.1} parent=47 // pred_check_branch
          %276 = sbr.rel (%p274) target = $region56
        $region55: #{tpu_custom_call.1} parent=47 // pred_region
          %278 = dma.done [#allocation6], 256
        $region56: #{tpu_custom_call.1} parent=47 // pred_fallthru
          _
        %p279 = scmp.lt.s32.totalorder %s23, 1
        %s280 = scalar_select %p279, %s23, 1
        %s281 = smul.addr %s280, 8
        %s282 = scalar_lea.vmem %s0, %s281
        %p283 = pneg %p44
        %p284 = pneg %p41
        %p285 = pneg %p65
        %p286 = pneg %p62
        %p287 = pneg %p86
        %p288 = pneg %p83
        %p289 = pneg %p107
        %p290 = pneg %p104
        %p291 = pneg %p128
        %p292 = pneg %p125
        %p293 = pneg %p149
        %p294 = pneg %p146
        %p295 = pneg %p170
        %p296 = pneg %p167
        %p297 = pneg %p196
        %p298 = pneg %p193
        %s299 = sand.u32 %s183, 1
        %s300 = scalar_lea.sflag [#allocation4], %s299
        %s301 = sand.u32 %s183, 1
        %s302 = smul.addr %s301, 8
        %s303 = scalar_lea.vmem [#allocation7], %s302
        %p304 = scmp.lt.s32.totalorder %s23, 1
        %s305 = scalar_select %p304, %s23, 1
        %s306 = smul.addr %s305, 8
        %s307 = scalar_lea.vmem %s0, %s306
        %v309 = vld [vmem:[%s307] sm:$0xff]
        %v310 = vld [vmem:[#allocation2] sm:$0xf]
        %v311 = vld [vmem:[#allocation2 + $0x4] sm:$0xf]
        %v312 = vld [vmem:[#allocation2 + $0x8] sm:$0xf]
        %v313 = vld [vmem:[#allocation2 + $0xc] sm:$0xf]
        %v314 = vld [vmem:[%s2] sm:$0x1]
        %v315 = vpack.c.bf16 %v309, %v309
        %v317 = vperm.slane %v314, 0
        %v323 = vunpack.c.l.b16 %v310
        %v324 = vunpack.c.l.b16 %v311
        %v325 = vunpack.c.l.b16 %v312
        %v326 = vunpack.c.l.b16 %v313
        %v327 = vpack.c.b16 %v324, %v323
        %v328 = vpack.c.b16 %v326, %v325
        %vm331 = vcmask 261120
        %v333 = vsel %vm331, %v315, 0
        %335 = vmatpush.bf16.msra.mxu0 0
        %336 = vmatpush.bf16.msra.mxu0 0
        %337 = vmatpush.bf16.msra.mxu0 0
        %338 = vmatpush.bf16.msra.mxu0 0
        %339 = vmatpush.bf16.msra.mxu0 0
        %340 = vmatpush.bf16.msra.mxu0 0
        %341 = vmatpush.bf16.msra.mxu0 %v328
        %342 = vmatpush.bf16.msra.mxu0 %v327
        %343 = vmatmul.bf16.gmra.mxu0 %v333
        %v344 = vpop.f32.mrf.mxu0
        %v345 = vadd.f32 %v317, %v344
        %v346 = vpop.f32.mrf.mxu0
        %347 = vdwg.mxu0
        %v348 = vmax.f32 %v345, 0.0
        %v349 = vld [vmem:[#allocation5] sm:$0xf]
        %v350 = vld [vmem:[#allocation5 + $0x4] sm:$0xf]
        %v351 = vld [vmem:[#allocation5 + $0x8] sm:$0xf]
        %v352 = vld [vmem:[#allocation5 + $0xc] sm:$0xf]
        %v353 = vld [vmem:[%s4] sm:$0x1]
        %v354 = vpack.c.bf16 %v348, %v348
        %v356 = vperm.slane %v353, 0
        %v362 = vunpack.c.l.b16 %v349
        %v363 = vunpack.c.l.b16 %v350
        %v364 = vunpack.c.l.b16 %v351
        %v365 = vunpack.c.l.b16 %v352
        %v366 = vpack.c.b16 %v363, %v362
        %v367 = vpack.c.b16 %v365, %v364
        %v371 = vsel %vm331, %v354, 0
        %373 = vmatpush.bf16.msra.mxu0 0
        %374 = vmatpush.bf16.msra.mxu0 0
        %375 = vmatpush.bf16.msra.mxu0 0
        %376 = vmatpush.bf16.msra.mxu0 0
        %377 = vmatpush.bf16.msra.mxu0 0
        %378 = vmatpush.bf16.msra.mxu0 0
        %379 = vmatpush.bf16.msra.mxu0 %v367
        %380 = vmatpush.bf16.msra.mxu0 %v366
        %381 = vmatmul.bf16.gmra.mxu0 %v371
        %v382 = vpop.f32.mrf.mxu0
        %v383 = vadd.f32 %v356, %v382
        %v384 = vpop.f32.mrf.mxu0
        %385 = vdwg.mxu0
        %v386 = vmax.f32 %v383, 0.0
        %v387 = vld [vmem:[%s5] sm:$0xf]
        %v388 = vld [vmem:[%s5 + $0x4] sm:$0xf]
        %v389 = vld [vmem:[%s5 + $0x8] sm:$0xf]
        %v390 = vld [vmem:[%s5 + $0xc] sm:$0xf]
        %v391 = vld [vmem:[%s6] sm:$0x1]
        %v392 = vpack.c.bf16 %v386, %v386
        %v394 = vperm.slane %v391, 0
        %v400 = vunpack.c.l.b16 %v387
        %v401 = vunpack.c.l.b16 %v388
        %v402 = vunpack.c.l.b16 %v389
        %v403 = vunpack.c.l.b16 %v390
        %v404 = vpack.c.b16 %v401, %v400
        %v405 = vpack.c.b16 %v403, %v402
        %v409 = vsel %vm331, %v392, 0
        %411 = vmatpush.bf16.msra.mxu0 0
        %412 = vmatpush.bf16.msra.mxu0 0
        %413 = vmatpush.bf16.msra.mxu0 0
        %414 = vmatpush.bf16.msra.mxu0 0
        %415 = vmatpush.bf16.msra.mxu0 0
        %416 = vmatpush.bf16.msra.mxu0 0
        %417 = vmatpush.bf16.msra.mxu0 %v405
        %418 = vmatpush.bf16.msra.mxu0 %v404
        %419 = vmatmul.bf16.gmra.mxu0 %v409
        %v420 = vpop.f32.mrf.mxu0
        %v421 = vadd.f32 %v394, %v420
        %v422 = vpop.f32.mrf.mxu0
        %423 = vdwg.mxu0
        %v424 = vxor.u32 %v421, 2147483648
        %v425 = vmul.f32 %v424, 1.442695
        %v426 = vpow.pop %v425
        %v427 = vadd.f32 %v426, 1.0
        %v428 = vrcp.pop %v427
        %v429 = vmul.f32 %v427, %v428
        %v430 = vsub.f32 1.0, %v429
        %v431 = vmul.f32 %v428, %v430
        %v432 = vadd.f32 %v428, %v431
        %vm433 = vweird.f32 %v427
        %vm434 = vweird.f32 %v428
        %vm435 = vmor %vm433, %vm434
        %v436 = vsel %vm435, %v428, %v432
        %v437 = vand.u32 2147483647, %v427
        %vm438 = vcmp.eq.f32.partialorder %v437, 8.507059e+37
        %v439 = vand.u32 %v427, 2147483648
        %v440 = vor.u32 1.1754944e-38, %v439
        %v441 = vsel %vm438, %v440, %v436
        %v442 = vmul.f32 1.0, %v441
        %vm443 = vcmask 130048
        %444 = vst.msk [vmem:[%s303] sm:$0xff] %vm443, %v442
        %s445 = sand.u32 %s183, 1
        %s446 = scalar_lea.sflag [#allocation4], %s445
        %s447 = sand.u32 %s183, 1
        %s448 = smul.addr %s447, 8
        %s449 = scalar_lea.vmem [#allocation7], %s448
        // Predicated region
        $region57: #{tpu_custom_call.1} parent=47 // pred_check
          %p450 = pneg %p193
        $region58: #{tpu_custom_call.1} parent=47 // pred_check_branch
          %452 = sbr.rel (%p450) target = $region60
        $region59: #{tpu_custom_call.1} parent=47 // pred_region
          %454 = vsyncadd %s446, 0
          %s455 = smul.addr %s23, 8
          %s456 = scalar_lea.hbm %s7, %s455
          %s458 = sshll.u32 %s449, 4
          %s459 = int_to_ptr.vmem [resolvable:$true] %s458
          %s460 = sshll.u32 %s456, 4
          %s461 = int_to_ptr.hbm [resolvable:$true] %s460
          %463 = dma.vmem_to_hbm [thread:$0]  %s459, 128, %s461, %s446
        $region60: #{tpu_custom_call.1} parent=47 // pred_fallthru
          _
      $region48: #{tpu_custom_call.1} parent=5 // pred_fallthru
        _
      %p464 = scmp.le.s32.totalorder 2, %s18
      // Predicated region
      $region61: #{tpu_custom_call.1} parent=5 // pred_check
        %p465 = pneg %p464
      $region62: #{tpu_custom_call.1} parent=5 // pred_check_branch
        %467 = sbr.rel (%p465) target = $region64
      $region63: #{tpu_custom_call.1} parent=5 // pred_region
        %s468 = ssub.s32 %s18, 2
        // Predicated region
        $region65: #{tpu_custom_call.1} parent=63 // pred_check
          %p469 = pneg %p199
        $region66: #{tpu_custom_call.1} parent=63 // pred_check_branch
          %471 = sbr.rel (%p469) target = $region68
        $region67: #{tpu_custom_call.1} parent=63 // pred_region
          %s472 = sand.u32 %s184, 1
          %s473 = scalar_lea.sflag [#allocation4], %s472
          %s474 = sand.u32 %s184, 1
          %s475 = smul.addr %s474, 8
          %s476 = scalar_lea.vmem [#allocation7], %s475
          %478 = dma.done %s473, 128
        $region68: #{tpu_custom_call.1} parent=63 // pred_fallthru
          _
      $region64: #{tpu_custom_call.1} parent=5 // pred_fallthru
        _
    $region6: #{tpu_custom_call.1} parent=1 // loop_footer
      %s22 = sadd.s32 1, %s18
    $region7: #{tpu_custom_call.1} parent=1 // loop_footer_branch
      %17 = sbr.rel target = $region3
    $region8: #{tpu_custom_call.1} parent=1 // loop_exit
      _
    %479 = vsyncpa [#allocation3], 1
    %s480 = scalar_lea.sflag [#allocation3], 1
    %481 = vsyncpa %s480, 1
    %482 = vsyncpa [#allocation6], 1
    %483 = vsyncpa [#allocation4], 1
    %s484 = scalar_lea.sflag [#allocation4], 1
    %485 = vsyncpa %s484, 1

// kernel: tpu_custom_call.1
$region0: #{tpu_custom_call.1}
  #allocation0 [shape = 'u32[]', space=smem, size = 0x4, offset = 0x4, fixed_abs, tag = 'smem constant byte address 0x4 - core index']
  #allocation1 [shape = 'u32[72,128]{1,0:T(1,128)}', space=vmem, size = 0x9000, scoped, tag = 'internal scratch']
  %s0 = inlined_call_operand.vmem [shape: f32[16,32], index: 0, kind: input, shape index: {}]
  %s1 = inlined_call_operand.hbm [shape: bf16[32,32], index: 1, kind: input, shape index: {}]
  %s2 = inlined_call_operand.vmem [shape: f32[1,32], index: 2, kind: input, shape index: {}]
  %s3 = inlined_call_operand.hbm [shape: bf16[32,32], index: 3, kind: input, shape index: {}]
  %s4 = inlined_call_operand.vmem [shape: f32[1,32], index: 4, kind: input, shape index: {}]
  %s5 = inlined_call_operand.vmem [shape: bf16[32,16], index: 5, kind: input, shape index: {}]
  %s6 = inlined_call_operand.vmem [shape: f32[1,16], index: 6, kind: input, shape index: {}]
  %s7 = inlined_call_operand.hbm [shape: f32[16,16], index: 7, kind: output, shape index: {}]
  %s8 = sld [smem:[#allocation0]]
  $region69: #{tpu_custom_call.1} parent=0
    _
  %s10 = ssub.s32 1, %s8
  %s11 = scalar_select 0, %s10, %s8
  $region1: #{tpu_custom_call.1} parent=0
    #allocation2 [shape = 'u8[8192]{0}', space=vmem, size = 0x2000, scoped, tag = 'input window, operand 1, single buffered']
    #allocation3 [shape = 's32[2]{0}', space=sflag, size = 0x8, scoped, tag = 'scoped memory for tpu_custom_call.1']
    #allocation4 [shape = 's32[2]{0}', space=sflag, size = 0x8, scoped, tag = 'scoped memory for tpu_custom_call.1']
    #allocation5 [shape = 'u8[8192]{0}', space=vmem, size = 0x2000, scoped, tag = 'input window, operand 3, single buffered']
    #allocation6 [shape = 's32[1]{0}', space=sflag, size = 0x4, scoped, tag = 'scoped memory for tpu_custom_call.1']
    #allocation7 [shape = 'u8[8192]{0}', space=vmem, size = 0x2000, scoped, tag = 'output window, operand 0']
    %12 = vsyncpa [#allocation3], 0
    %13 = vsyncpa [#allocation6], 0
    %14 = vsyncpa [#allocation4], 0
    %s15 = scalar_lea.sflag [#allocation4], 1
    %16 = vsyncpa %s15, 0
    loop: start=0, step=1, limit=4
    $region2: #{tpu_custom_call.1} parent=1 // loop_pre_header
      _
    $region3: #{tpu_custom_call.1} parent=1 // loop_header
      %s18 = sphi 0, %s22
      %p19 = scmp.ge.s32.totalorder %s18, 4
      %s28 = sphi 0, %s30
      %s31 = sphi 0, %s28
      %s32 = sphi 0, %s31
      %s48 = sphi 0, %s32
      %s52 = sphi 0, %s52
      %s54 = sphi 0, %s52
      %s55 = sphi 0, %s54
      %s69 = sphi 0, %s55
      %s73 = sphi 0, %s73
      %s75 = sphi 0, %s73
      %s76 = sphi 0, %s75
      %s90 = sphi 0, %s76
      %s94 = sphi 0, %s94
      %s96 = sphi 0, %s94
      %s97 = sphi 0, %s96
      %s111 = sphi 0, %s97
      %s115 = sphi 0, %s115
      %s117 = sphi 0, %s115
      %s118 = sphi 0, %s117
      %s132 = sphi 0, %s118
      %s136 = sphi 0, %s136
      %s138 = sphi 0, %s136
      %s139 = sphi 0, %s138
      %s153 = sphi 0, %s139
      %s157 = sphi 0, %s157
      %s159 = sphi 0, %s157
      %s160 = sphi 0, %s159
      %s174 = sphi 0, %s160
      %s180 = sphi 0, %s182
      %s183 = sphi 0, %s180
      %s184 = sphi 0, %s183
      %s200 = sphi 0, %s184
    $region4: #{tpu_custom_call.1} parent=1 // loop_header_branch
      %21 = sbr.rel (%p19) target = $region8
    $region5: #{tpu_custom_call.1} parent=1 // loop_body
      %s23 = ssub.s32 %s18, 1
      %s24 = ssub.s32 %s18, 2
      %s25 = sadd.s32 %s18, 1
      %s26 = ssub.s32 %s18, %s25
      %p27 = scmp.eq.s32.totalorder %s26, 0
      %s29 = sadd.s32 %s28, 1
      %s30 = scalar_select %p27, %s28, %s29
      %p33 = pneg %p27
      %p34 = scmp.eq.s32.totalorder %s18, 1
      %p35 = por %p33, %p34
      %p36 = scmp.ne.s32.totalorder %s28, %s31
      %p37 = scmp.eq.s32.totalorder %s18, 0
      %p38 = por %p36, %p37
      %p39 = scmp.ne.s32.totalorder %s28, %s31
      %p40 = scmp.eq.s32.totalorder %s23, 1
      %p41 = por %p39, %p40
      %p42 = scmp.ne.s32.totalorder %s31, %s32
      %p43 = scmp.eq.s32.totalorder %s23, 0
      %p44 = por %p42, %p43
      %p45 = scmp.ne.s32.totalorder %s31, %s32
      %p46 = scmp.eq.s32.totalorder %s24, 1
      %p47 = por %p45, %p46
      %p49 = scmp.ne.s32.totalorder %s32, %s48
      %p50 = scmp.eq.s32.totalorder %s24, 0
      %p51 = por %p49, %p50
      %s53 = sadd.s32 %s52, 1
      %p56 = scmp.eq.s32.totalorder %s18, 1
      %p57 = scmp.ne.s32.totalorder %s52, %s54
      %p58 = scmp.eq.s32.totalorder %s18, 0
      %p59 = por %p57, %p58
      %p60 = scmp.ne.s32.totalorder %s52, %s54
      %p61 = scmp.eq.s32.totalorder %s23, 1
      %p62 = por %p60, %p61
      %p63 = scmp.ne.s32.totalorder %s54, %s55
      %p64 = scmp.eq.s32.totalorder %s23, 0
      %p65 = por %p63, %p64
      %p66 = scmp.ne.s32.totalorder %s54, %s55
      %p67 = scmp.eq.s32.totalorder %s24, 1
      %p68 = por %p66, %p67
      %p70 = scmp.ne.s32.totalorder %s55, %s69
      %p71 = scmp.eq.s32.totalorder %s24, 0
      %p72 = por %p70, %p71
      %s74 = sadd.s32 %s73, 1
      %p77 = scmp.eq.s32.totalorder %s18, 1
      %p78 = scmp.ne.s32.totalorder %s73, %s75
      %p79 = scmp.eq.s32.totalorder %s18, 0
      %p80 = por %p78, %p79
      %p81 = scmp.ne.s32.totalorder %s73, %s75
      %p82 = scmp.eq.s32.totalorder %s23, 1
      %p83 = por %p81, %p82
      %p84 = scmp.ne.s32.totalorder %s75, %s76
      %p85 = scmp.eq.s32.totalorder %s23, 0
      %p86 = por %p84, %p85
      %p87 = scmp.ne.s32.totalorder %s75, %s76
      %p88 = scmp.eq.s32.totalorder %s24, 1
      %p89 = por %p87, %p88
      %p91 = scmp.ne.s32.totalorder %s76, %s90
      %p92 = scmp.eq.s32.totalorder %s24, 0
      %p93 = por %p91, %p92
      %s95 = sadd.s32 %s94, 1
      %p98 = scmp.eq.s32.totalorder %s18, 1
      %p99 = scmp.ne.s32.totalorder %s94, %s96
      %p100 = scmp.eq.s32.totalorder %s18, 0
      %p101 = por %p99, %p100
      %p102 = scmp.ne.s32.totalorder %s94, %s96
      %p103 = scmp.eq.s32.totalorder %s23, 1
      %p104 = por %p102, %p103
      %p105 = scmp.ne.s32.totalorder %s96, %s97
      %p106 = scmp.eq.s32.totalorder %s23, 0
      %p107 = por %p105, %p106
      %p108 = scmp.ne.s32.totalorder %s96, %s97
      %p109 = scmp.eq.s32.totalorder %s24, 1
      %p110 = por %p108, %p109
      %p112 = scmp.ne.s32.totalorder %s97, %s111
      %p113 = scmp.eq.s32.totalorder %s24, 0
      %p114 = por %p112, %p113
      %s116 = sadd.s32 %s115, 1
      %p119 = scmp.eq.s32.totalorder %s18, 1
      %p120 = scmp.ne.s32.totalorder %s115, %s117
      %p121 = scmp.eq.s32.totalorder %s18, 0
      %p122 = por %p120, %p121
      %p123 = scmp.ne.s32.totalorder %s115, %s117
      %p124 = scmp.eq.s32.totalorder %s23, 1
      %p125 = por %p123, %p124
      %p126 = scmp.ne.s32.totalorder %s117, %s118
      %p127 = scmp.eq.s32.totalorder %s23, 0
      %p128 = por %p126, %p127
      %p129 = scmp.ne.s32.totalorder %s117, %s118
      %p130 = scmp.eq.s32.totalorder %s24, 1
      %p131 = por %p129, %p130
      %p133 = scmp.ne.s32.totalorder %s118, %s132
      %p134 = scmp.eq.s32.totalorder %s24, 0
      %p135 = por %p133, %p134
      %s137 = sadd.s32 %s136, 1
      %p140 = scmp.eq.s32.totalorder %s18, 1
      %p141 = scmp.ne.s32.totalorder %s136, %s138
      %p142 = scmp.eq.s32.totalorder %s18, 0
      %p143 = por %p141, %p142
      %p144 = scmp.ne.s32.totalorder %s136, %s138
      %p145 = scmp.eq.s32.totalorder %s23, 1
      %p146 = por %p144, %p145
      %p147 = scmp.ne.s32.totalorder %s138, %s139
      %p148 = scmp.eq.s32.totalorder %s23, 0
      %p149 = por %p147, %p148
      %p150 = scmp.ne.s32.totalorder %s138, %s139
      %p151 = scmp.eq.s32.totalorder %s24, 1
      %p152 = por %p150, %p151
      %p154 = scmp.ne.s32.totalorder %s139, %s153
      %p155 = scmp.eq.s32.totalorder %s24, 0
      %p156 = por %p154, %p155
      %s158 = sadd.s32 %s157, 1
      %p161 = scmp.eq.s32.totalorder %s18, 1
      %p162 = scmp.ne.s32.totalorder %s157, %s159
      %p163 = scmp.eq.s32.totalorder %s18, 0
      %p164 = por %p162, %p163
      %p165 = scmp.ne.s32.totalorder %s157, %s159
      %p166 = scmp.eq.s32.totalorder %s23, 1
      %p167 = por %p165, %p166
      %p168 = scmp.ne.s32.totalorder %s159, %s160
      %p169 = scmp.eq.s32.totalorder %s23, 0
      %p170 = por %p168, %p169
      %p171 = scmp.ne.s32.totalorder %s159, %s160
      %p172 = scmp.eq.s32.totalorder %s24, 1
      %p173 = por %p171, %p172
      %p175 = scmp.ne.s32.totalorder %s160, %s174
      %p176 = scmp.eq.s32.totalorder %s24, 0
      %p177 = por %p175, %p176
      %s178 = ssub.s32 %s18, %s25
      %p179 = scmp.eq.s32.totalorder %s178, 0
      %s181 = sadd.s32 %s180, 1
      %s182 = scalar_select %p179, %s180, %s181
      %p185 = pneg %p179
      %p186 = scmp.eq.s32.totalorder %s18, 1
      %p187 = por %p185, %p186
      %p188 = scmp.ne.s32.totalorder %s180, %s183
      %p189 = scmp.eq.s32.totalorder %s18, 0
      %p190 = por %p188, %p189
      %p191 = scmp.ne.s32.totalorder %s180, %s183
      %p192 = scmp.eq.s32.totalorder %s23, 1
      %p193 = por %p191, %p192
      %p194 = scmp.ne.s32.totalorder %s183, %s184
      %p195 = scmp.eq.s32.totalorder %s23, 0
      %p196 = por %p194, %p195
      %p197 = scmp.ne.s32.totalorder %s183, %s184
      %p198 = scmp.eq.s32.totalorder %s24, 1
      %p199 = por %p197, %p198
      %p201 = scmp.ne.s32.totalorder %s184, %s200
      %p202 = scmp.eq.s32.totalorder %s24, 0
      %p203 = por %p201, %p202
      %p204 = scmp.le.s32.totalorder 1, %s18
      %p205 = scmp.lt.s32.totalorder %s18, 3
      %p206 = pnand %p204, %p205
      %p207 = pneg %p206
      // Predicated region
      $region9: #{tpu_custom_call.1} parent=5 // pred_check
        _
      $region10: #{tpu_custom_call.1} parent=5 // pred_check_branch
        %209 = sbr.rel (%p206) target = $region12
      $region11: #{tpu_custom_call.1} parent=5 // pred_region
        %s210 = ssub.s32 %s18, 1
        // Predicated region
        $region13: #{tpu_custom_call.1} parent=11 // pred_check
          %p211 = pneg %p65
        $region14: #{tpu_custom_call.1} parent=11 // pred_check_branch
          %213 = sbr.rel (%p211) target = $region16
        $region15: #{tpu_custom_call.1} parent=11 // pred_region
          %215 = vsyncadd [#allocation3], 0
          %s216 = sshll.u32 %s1, 4
          %s217 = int_to_ptr.hbm [resolvable:$true] %s216
          %s218 = sshll.u32 [#allocation2], 4
          %s219 = int_to_ptr.vmem [resolvable:$true] %s218
          %224 = dma.hbm_to_vmem [thread:$0]  %s217, 256, %s219, [#allocation3], 64, 64, 4
        $region16: #{tpu_custom_call.1} parent=11 // pred_fallthru
          _
        // Predicated region
        $region17: #{tpu_custom_call.1} parent=11 // pred_check
          %p225 = pneg %p86
        $region18: #{tpu_custom_call.1} parent=11 // pred_check_branch
          %227 = sbr.rel (%p225) target = $region20
        $region19: #{tpu_custom_call.1} parent=11 // pred_region
          _
        $region20: #{tpu_custom_call.1} parent=11 // pred_fallthru
          _
        // Predicated region
        $region21: #{tpu_custom_call.1} parent=11 // pred_check
          %p228 = pneg %p107
        $region22: #{tpu_custom_call.1} parent=11 // pred_check_branch
          %230 = sbr.rel (%p228) target = $region24
        $region23: #{tpu_custom_call.1} parent=11 // pred_region
          %232 = vsyncadd [#allocation6], 0
          %s233 = sshll.u32 %s3, 4
          %s234 = int_to_ptr.hbm [resolvable:$true] %s233
          %s235 = sshll.u32 [#allocation5], 4
          %s236 = int_to_ptr.vmem [resolvable:$true] %s235
          %241 = dma.hbm_to_vmem [thread:$0]  %s234, 256, %s236, [#allocation6], 64, 64, 4
        $region24: #{tpu_custom_call.1} parent=11 // pred_fallthru
          _
        // Predicated region
        $region25: #{tpu_custom_call.1} parent=11 // pred_check
          %p242 = pneg %p128
        $region26: #{tpu_custom_call.1} parent=11 // pred_check_branch
          %244 = sbr.rel (%p242) target = $region28
        $region27: #{tpu_custom_call.1} parent=11 // pred_region
          _
        $region28: #{tpu_custom_call.1} parent=11 // pred_fallthru
          _
        // Predicated region
        $region29: #{tpu_custom_call.1} parent=11 // pred_check
          %p245 = pneg %p149
        $region30: #{tpu_custom_call.1} parent=11 // pred_check_branch
          %247 = sbr.rel (%p245) target = $region32
        $region31: #{tpu_custom_call.1} parent=11 // pred_region
          _
        $region32: #{tpu_custom_call.1} parent=11 // pred_fallthru
          _
        // Predicated region
        $region33: #{tpu_custom_call.1} parent=11 // pred_check
          %p248 = pneg %p170
        $region34: #{tpu_custom_call.1} parent=11 // pred_check_branch
          %250 = sbr.rel (%p248) target = $region36
        $region35: #{tpu_custom_call.1} parent=11 // pred_region
          _
        $region36: #{tpu_custom_call.1} parent=11 // pred_fallthru
          _
      $region12: #{tpu_custom_call.1} parent=5 // pred_fallthru
        _
      %p251 = scmp.lt.s32.totalorder %s18, 2
      // Predicated region
      $region37: #{tpu_custom_call.1} parent=5 // pred_check
        %p252 = pneg %p251
      $region38: #{tpu_custom_call.1} parent=5 // pred_check_branch
        %254 = sbr.rel (%p252) target = $region40
      $region39: #{tpu_custom_call.1} parent=5 // pred_region
        // Predicated region
        $region41: #{tpu_custom_call.1} parent=39 // pred_check
          %p255 = pneg %p38
        $region42: #{tpu_custom_call.1} parent=39 // pred_check_branch
          %257 = sbr.rel (%p255) target = $region44
        $region43: #{tpu_custom_call.1} parent=39 // pred_region
          %p258 = scmp.lt.s32.totalorder %s18, 1
          %s259 = scalar_select %p258, %s18, 1
          %s260 = smul.addr %s259, 8
          %s261 = scalar_lea.vmem %s0, %s260
        $region44: #{tpu_custom_call.1} parent=39 // pred_fallthru
          _
      $region40: #{tpu_custom_call.1} parent=5 // pred_fallthru
        _
      %p262 = scmp.le.s32.totalorder 1, %s18
      %p263 = scmp.lt.s32.totalorder %s18, 3
      %p264 = pnand %p262, %p263
      %p265 = pneg %p264
      // Predicated region
      $region45: #{tpu_custom_call.1} parent=5 // pred_check
        _
      $region46: #{tpu_custom_call.1} parent=5 // pred_check_branch
        %267 = sbr.rel (%p264) target = $region48
      $region47: #{tpu_custom_call.1} parent=5 // pred_region
        %s268 = ssub.s32 %s18, 1
        // Predicated region
        $region49: #{tpu_custom_call.1} parent=47 // pred_check
          %p269 = pneg %p65
        $region50: #{tpu_custom_call.1} parent=47 // pred_check_branch
          %271 = sbr.rel (%p269) target = $region52
        $region51: #{tpu_custom_call.1} parent=47 // pred_region
          %273 = dma.done [#allocation3], 256
        $region52: #{tpu_custom_call.1} parent=47 // pred_fallthru
          _
        // Predicated region
        $region53: #{tpu_custom_call.1} parent=47 // pred_check
          %p274 = pneg %p107
        $region54: #{tpu_custom_call.1} parent=47 // pred_check_branch
          %276 = sbr.rel (%p274) target = $region56
        $region55: #{tpu_custom_call.1} parent=47 // pred_region
          %278 = dma.done [#allocation6], 256
        $region56: #{tpu_custom_call.1} parent=47 // pred_fallthru
          _
        %p279 = scmp.lt.s32.totalorder %s23, 1
        %s280 = scalar_select %p279, %s23, 1
        %s281 = smul.addr %s280, 8
        %s282 = scalar_lea.vmem %s0, %s281
        %p283 = pneg %p44
        %p284 = pneg %p41
        %p285 = pneg %p65
        %p286 = pneg %p62
        %p287 = pneg %p86
        %p288 = pneg %p83
        %p289 = pneg %p107
        %p290 = pneg %p104
        %p291 = pneg %p128
        %p292 = pneg %p125
        %p293 = pneg %p149
        %p294 = pneg %p146
        %p295 = pneg %p170
        %p296 = pneg %p167
        %p297 = pneg %p196
        %p298 = pneg %p193
        %s299 = sand.u32 %s183, 1
        %s300 = scalar_lea.sflag [#allocation4], %s299
        %s301 = sand.u32 %s183, 1
        %s302 = smul.addr %s301, 8
        %s303 = scalar_lea.vmem [#allocation7], %s302
        %p304 = scmp.lt.s32.totalorder %s23, 1
        %s305 = scalar_select %p304, %s23, 1
        %s306 = smul.addr %s305, 8
        %s307 = scalar_lea.vmem %s0, %s306
        %v309 = vld [vmem:[%s307] sm:$0xff]
        %v310 = vld [vmem:[#allocation2] sm:$0xf]
        %v311 = vld [vmem:[#allocation2 + $0x4] sm:$0xf]
        %v312 = vld [vmem:[#allocation2 + $0x8] sm:$0xf]
        %v313 = vld [vmem:[#allocation2 + $0xc] sm:$0xf]
        %v314 = vld [vmem:[%s2] sm:$0x1]
        %v315 = vpack.c.bf16 %v309, %v309
        %v317 = vperm.slane %v314, 0
        %v323 = vunpack.c.l.b16 %v310
        %v324 = vunpack.c.l.b16 %v311
        %v325 = vunpack.c.l.b16 %v312
        %v326 = vunpack.c.l.b16 %v313
        %v327 = vpack.c.b16 %v324, %v323
        %v328 = vpack.c.b16 %v326, %v325
        %vm331 = vcmask 261120
        %v333 = vsel %vm331, %v315, 0
        %335 = vmatpush.bf16.msra.mxu0 0
        %336 = vmatpush.bf16.msra.mxu0 0
        %337 = vmatpush.bf16.msra.mxu0 0
        %338 = vmatpush.bf16.msra.mxu0 0
        %339 = vmatpush.bf16.msra.mxu0 0
        %340 = vmatpush.bf16.msra.mxu0 0
        %341 = vmatpush.bf16.msra.mxu0 %v328
        %342 = vmatpush.bf16.msra.mxu0 %v327
        %343 = vmatmul.bf16.gmra.mxu0 %v333
        %v344 = vpop.f32.mrf.mxu0
        %v345 = vadd.f32 %v317, %v344
        %v346 = vpop.f32.mrf.mxu0
        %347 = vdwg.mxu0
        %v348 = vmax.f32 %v345, 0.0
        %v349 = vld [vmem:[#allocation5] sm:$0xf]
        %v350 = vld [vmem:[#allocation5 + $0x4] sm:$0xf]
        %v351 = vld [vmem:[#allocation5 + $0x8] sm:$0xf]
        %v352 = vld [vmem:[#allocation5 + $0xc] sm:$0xf]
        %v353 = vld [vmem:[%s4] sm:$0x1]
        %v354 = vpack.c.bf16 %v348, %v348
        %v356 = vperm.slane %v353, 0
        %v362 = vunpack.c.l.b16 %v349
        %v363 = vunpack.c.l.b16 %v350
        %v364 = vunpack.c.l.b16 %v351
        %v365 = vunpack.c.l.b16 %v352
        %v366 = vpack.c.b16 %v363, %v362
        %v367 = vpack.c.b16 %v365, %v364
        %v371 = vsel %vm331, %v354, 0
        %373 = vmatpush.bf16.msra.mxu0 0
        %374 = vmatpush.bf16.msra.mxu0 0
        %375 = vmatpush.bf16.msra.mxu0 0
        %376 = vmatpush.bf16.msra.mxu0 0
        %377 = vmatpush.bf16.msra.mxu0 0
        %378 = vmatpush.bf16.msra.mxu0 0
        %379 = vmatpush.bf16.msra.mxu0 %v367
        %380 = vmatpush.bf16.msra.mxu0 %v366
        %381 = vmatmul.bf16.gmra.mxu0 %v371
        %v382 = vpop.f32.mrf.mxu0
        %v383 = vadd.f32 %v356, %v382
        %v384 = vpop.f32.mrf.mxu0
        %385 = vdwg.mxu0
        %v386 = vmax.f32 %v383, 0.0
        %v387 = vld [vmem:[%s5] sm:$0xf]
        %v388 = vld [vmem:[%s5 + $0x4] sm:$0xf]
        %v389 = vld [vmem:[%s5 + $0x8] sm:$0xf]
        %v390 = vld [vmem:[%s5 + $0xc] sm:$0xf]
        %v391 = vld [vmem:[%s6] sm:$0x1]
        %v392 = vpack.c.bf16 %v386, %v386
        %v394 = vperm.slane %v391, 0
        %v400 = vunpack.c.l.b16 %v387
        %v401 = vunpack.c.l.b16 %v388
        %v402 = vunpack.c.l.b16 %v389
        %v403 = vunpack.c.l.b16 %v390
        %v404 = vpack.c.b16 %v401, %v400
        %v405 = vpack.c.b16 %v403, %v402
        %v409 = vsel %vm331, %v392, 0
        %411 = vmatpush.bf16.msra.mxu0 0
        %412 = vmatpush.bf16.msra.mxu0 0
        %413 = vmatpush.bf16.msra.mxu0 0
        %414 = vmatpush.bf16.msra.mxu0 0
        %415 = vmatpush.bf16.msra.mxu0 0
        %416 = vmatpush.bf16.msra.mxu0 0
        %417 = vmatpush.bf16.msra.mxu0 %v405
        %418 = vmatpush.bf16.msra.mxu0 %v404
        %419 = vmatmul.bf16.gmra.mxu0 %v409
        %v420 = vpop.f32.mrf.mxu0
        %v421 = vadd.f32 %v394, %v420
        %v422 = vpop.f32.mrf.mxu0
        %423 = vdwg.mxu0
        %v424 = vxor.u32 %v421, 2147483648
        %v425 = vmul.f32 %v424, 1.442695
        %v426 = vpow.pop %v425
        %v427 = vadd.f32 %v426, 1.0
        %v428 = vrcp.pop %v427
        %v429 = vmul.f32 %v427, %v428
        %v430 = vsub.f32 1.0, %v429
        %v431 = vmul.f32 %v428, %v430
        %v432 = vadd.f32 %v428, %v431
        %vm433 = vweird.f32 %v427
        %vm434 = vweird.f32 %v428
        %vm435 = vmor %vm433, %vm434
        %v436 = vsel %vm435, %v428, %v432
        %v437 = vand.u32 2147483647, %v427
        %vm438 = vcmp.eq.f32.partialorder %v437, 8.507059e+37
        %v439 = vand.u32 %v427, 2147483648
        %v440 = vor.u32 1.1754944e-38, %v439
        %v441 = vsel %vm438, %v440, %v436
        %v442 = vmul.f32 1.0, %v441
        %vm443 = vcmask 130048
        %444 = vst.msk [vmem:[%s303] sm:$0xff] %vm443, %v442
        %s445 = sand.u32 %s183, 1
        %s446 = scalar_lea.sflag [#allocation4], %s445
        %s447 = sand.u32 %s183, 1
        %s448 = smul.addr %s447, 8
        %s449 = scalar_lea.vmem [#allocation7], %s448
        // Predicated region
        $region57: #{tpu_custom_call.1} parent=47 // pred_check
          %p450 = pneg %p193
        $region58: #{tpu_custom_call.1} parent=47 // pred_check_branch
          %452 = sbr.rel (%p450) target = $region60
        $region59: #{tpu_custom_call.1} parent=47 // pred_region
          %454 = vsyncadd %s446, 0
          %s455 = smul.addr %s23, 8
          %s456 = scalar_lea.hbm %s7, %s455
          %s458 = sshll.u32 %s449, 4
          %s459 = int_to_ptr.vmem [resolvable:$true] %s458
          %s460 = sshll.u32 %s456, 4
          %s461 = int_to_ptr.hbm [resolvable:$true] %s460
          %463 = dma.vmem_to_hbm [thread:$0]  %s459, 128, %s461, %s446
        $region60: #{tpu_custom_call.1} parent=47 // pred_fallthru
          _
      $region48: #{tpu_custom_call.1} parent=5 // pred_fallthru
        _
      %p464 = scmp.le.s32.totalorder 2, %s18
      // Predicated region
      $region61: #{tpu_custom_call.1} parent=5 // pred_check
        %p465 = pneg %p464
      $region62: #{tpu_custom_call.1} parent=5 // pred_check_branch
        %467 = sbr.rel (%p465) target = $region64
      $region63: #{tpu_custom_call.1} parent=5 // pred_region
        %s468 = ssub.s32 %s18, 2
        // Predicated region
        $region65: #{tpu_custom_call.1} parent=63 // pred_check
          %p469 = pneg %p199
        $region66: #{tpu_custom_call.1} parent=63 // pred_check_branch
          %471 = sbr.rel (%p469) target = $region68
        $region67: #{tpu_custom_call.1} parent=63 // pred_region
          %s472 = sand.u32 %s184, 1
          %s473 = scalar_lea.sflag [#allocation4], %s472
          %s474 = sand.u32 %s184, 1
          %s475 = smul.addr %s474, 8
          %s476 = scalar_lea.vmem [#allocation7], %s475
          %478 = dma.done %s473, 128
        $region68: #{tpu_custom_call.1} parent=63 // pred_fallthru
          _
      $region64: #{tpu_custom_call.1} parent=5 // pred_fallthru
        _
    $region6: #{tpu_custom_call.1} parent=1 // loop_footer
      %s22 = sadd.s32 1, %s18
    $region7: #{tpu_custom_call.1} parent=1 // loop_footer_branch
      %17 = sbr.rel target = $region3
    $region8: #{tpu_custom_call.1} parent=1 // loop_exit
      _
    %479 = vsyncpa [#allocation3], 1
    %s480 = scalar_lea.sflag [#allocation3], 1
    %481 = vsyncpa %s480, 1
    %482 = vsyncpa [#allocation6], 1
    %483 = vsyncpa [#allocation4], 1
    %s484 = scalar_lea.sflag [#allocation4], 1
    %485 = vsyncpa %s484, 1

</llo_original>
